<compile_context>
chip_gen: v7x
topology: tpu7x:2x2x1
jax: 0.10.0
libtpu: 0.0.40
codegen_flags: <defaults>
</compile_context>

<pallas_src>
import jax
import jax.numpy as jnp
from jax.experimental import pallas as pl
from jax.experimental.pallas import tpu as pltpu  # noqa: F401  (TPU backend)


def _round_up(n, m):
    return ((n + m - 1) // m) * m


# ----------------------------------------------------------------------------
# Pallas kernel: fused (Linear -> ReLU) trunk + fused policy/value head.
# ----------------------------------------------------------------------------
def _go_model_kernel(x_ref, w1_ref, b1_ref, wh_ref, bh_ref, out_ref):
    # x: (R, Fpad) bf16, w1: (Fpad, d_model) bf16 -> f32 accumulate on the MXU.
    feats = jnp.dot(x_ref[...], w1_ref[...], preferred_element_type=jnp.float32)
    feats = jnp.maximum(feats + b1_ref[...], 0.0)                   # (R, d_model) f32

    # Single fused head matmul: [policy | value | zero-pad] -> (R, Hpad).
    heads = jnp.dot(feats.astype(jnp.bfloat16), wh_ref[...],
                    preferred_element_type=jnp.float32)
    out_ref[...] = heads + bh_ref[...]                              # (R, Hpad) f32


def _fused_forward(xf, w1, b1, wh, bh):
    rows, f_pad = xf.shape
    d_model = w1.shape[1]
    h_pad = wh.shape[1]

    flops = 2 * rows * (f_pad * d_model + d_model * h_pad)
    bytes_accessed = (xf.size * 2 + w1.size * 2 + wh.size * 2
                      + b1.size * 4 + bh.size * 4 + rows * h_pad * 4)

    # Grid-less call: every operand is one full-array VMEM block (< 2 MB total),
    # so there is no per-step pipeline overhead and no ragged/masked stores.
    return pl.pallas_call(
        _go_model_kernel,
        out_shape=jax.ShapeDtypeStruct((rows, h_pad), jnp.float32),
        cost_estimate=pl.CostEstimate(
            flops=flops, transcendentals=0, bytes_accessed=bytes_accessed),
    )(xf, w1, b1, wh, bh)


# ----------------------------------------------------------------------------
# Parameter construction (deterministic, mimics nn.Linear's uniform init).
# All padding / head fusion / bf16 casting happens ONCE here, not per call.
# ----------------------------------------------------------------------------
def init_params(key, in_features, d_model, action_space_size):
    def linear(k, fan_in, fan_out):
        kw, kb = jax.random.split(k)
        bound = 1.0 / jnp.sqrt(jnp.float32(fan_in))
        w = jax.random.uniform(kw, (fan_in, fan_out), jnp.float32, -bound, bound)
        b = jax.random.uniform(kb, (fan_out,), jnp.float32, -bound, bound)
        return w, b

    k1, k2, k3 = jax.random.split(key, 3)
    w1, b1 = linear(k1, in_features, d_model)            # shared_feature_extractor
    wp, bp = linear(k2, d_model, action_space_size)      # policy_head
    wv, bv = linear(k3, d_model, 1)                      # value_head

    f_pad = _round_up(in_features, 128)                  # 1083 -> 1152
    h_out = action_space_size + 1                        # policy + value
    h_pad = _round_up(h_out, 128)                        # 363  -> 384

    # Zero-pad K rows of W1 (numerically exact since x columns are also padded
    # with zeros), cast to bf16 once.
    w1_p = (jnp.zeros((f_pad, d_model), jnp.float32)
            .at[:in_features, :].set(w1).astype(jnp.bfloat16))

    # Fuse [policy | value] heads into one lane-dense weight, pad to 384 lanes.
    wh = jnp.concatenate([wp, wv], axis=1)               # (d_model, A+1)
    wh_p = (jnp.zeros((d_model, h_pad), jnp.float32)
            .at[:, :h_out].set(wh).astype(jnp.bfloat16))
    bh = jnp.concatenate([bp, bv], axis=0)               # (A+1,)
    bh_p = jnp.zeros((h_pad,), jnp.float32).at[:h_out].set(bh)

    return dict(
        in_features=in_features, f_pad=f_pad,
        d_model=d_model, action_space_size=action_space_size, h_pad=h_pad,
        w1=w1_p, b1=b1.reshape(1, d_model),
        wh=wh_p, bh=bh_p.reshape(1, h_pad),
    )


# ----------------------------------------------------------------------------
# Model wrapper (glue in plain JAX: flatten, activation padding, slicing).
# ----------------------------------------------------------------------------
def abstract_go_model_forward(x, params, cache=None):
    if cache is not None:
        assert x.shape[0] == 1 and x.shape[1] == 1, "inference mode expects (1, 1, ...)"
    else:
        assert x.shape[0] == 1, "training mode expects (1, S, ...)"

    B, S = x.shape[0], x.shape[1]
    if x.ndim == 4:
        x_flat = x.reshape(B, S, -1)
    else:
        x_flat = x

    rows = B * S
    fin = params["in_features"]
    xf = x_flat.reshape(rows, fin).astype(jnp.float32)
    # Zero-pad the contraction dim to the 128-aligned width, cast to bf16.
    xf = jnp.pad(xf, ((0, 0), (0, params["f_pad"] - fin))).astype(jnp.bfloat16)

    out = _fused_forward(xf, params["w1"], params["b1"],
                         params["wh"], params["bh"])     # (rows, h_pad) f32

    a = params["action_space_size"]
    logits = out[:, :a].reshape(B, S, a)
    value = out[:, a:a + 1].reshape(B, S, 1)
    return logits, value


# ----------------------------------------------------------------------------
# Pure-JAX reference (same bf16 operands, f32 accumulation) for correctness.
# ----------------------------------------------------------------------------
def reference_forward(x, params):
    B, S = x.shape[0], x.shape[1]
    fin = params["in_features"]
    xf = x.reshape(B * S, -1).astype(jnp.float32)
    xf = jnp.pad(xf, ((0, 0), (0, params["f_pad"] - fin))).astype(jnp.bfloat16)

    feats = jnp.dot(xf, params["w1"], preferred_element_type=jnp.float32)
    feats = jnp.maximum(feats + params["b1"], 0.0).astype(jnp.bfloat16)

    out = jnp.dot(feats, params["wh"], preferred_element_type=jnp.float32)
    out = out + params["bh"]

    a = params["action_space_size"]
    return (out[:, :a].reshape(B, S, a),
            out[:, a:a + 1].reshape(B, S, 1))


if __name__ == "__main__":
    # Shapes consistent with the module's docstring: (1, S, 19*19, 3).
    B, S, L, D = 1, 8, 19 * 19, 3
    d_model = 256
    action_space_size = 19 * 19 + 1  # 362 (board moves + pass)

    key = jax.random.PRNGKey(0)
    k_x, k_p = jax.random.split(key)
    x = jax.random.normal(k_x, (B, S, L, D), jnp.float32)
    params = init_params(k_p, L * D, d_model, action_space_size)

    logits, value = abstract_go_model_forward(x, params)
    logits = jax.block_until_ready(logits)
    value = jax.block_until_ready(value)

    ref_logits, ref_value = reference_forward(x, params)

    assert logits.shape == (B, S, action_space_size), logits.shape
    assert value.shape == (B, S, 1), value.shape
    assert jnp.allclose(logits, ref_logits, atol=1e-2, rtol=1e-2)
    assert jnp.allclose(value, ref_value, atol=1e-2, rtol=1e-2)

    print("KERNEL_OK")
</pallas_src>

<mosaic_0001>
module attributes {stable_mosaic.version = 11 : i64} {
  func.func @_go_model_kernel(%arg0: memref<8x1152xbf16, #tpu.memory_space<vmem>>, %arg1: memref<1152x256xbf16, #tpu.memory_space<vmem>>, %arg2: memref<1x256xf32, #tpu.memory_space<vmem>>, %arg3: memref<256x384xbf16, #tpu.memory_space<vmem>>, %arg4: memref<1x384xf32, #tpu.memory_space<vmem>>, %arg5: memref<8x384xf32, #tpu.memory_space<vmem>>) attributes {dimension_semantics = [], scalar_prefetch = 0 : i64, scratch_operands = 0 : i64, tpu.core_type = #tpu.core_type<tc>} {
    %c0 = arith.constant 0 : index
    %c0_0 = arith.constant 0 : index
    %0 = vector.load %arg0[%c0, %c0_0] : memref<8x1152xbf16, #tpu.memory_space<vmem>>, vector<8x1152xbf16>
    %c0_1 = arith.constant 0 : index
    %c0_2 = arith.constant 0 : index
    %1 = vector.load %arg1[%c0_1, %c0_2] : memref<1152x256xbf16, #tpu.memory_space<vmem>>, vector<1152x256xbf16>
    %cst = arith.constant dense<0.000000e+00> : vector<8x256xf32>
    %2 = tpu.matmul %0, %1, %cst {dimension_numbers = #tpu.dot_dimension_numbers<[1], [0], [0], [1], [0, 0, 1, 1], [], []>} : vector<8x1152xbf16>, vector<1152x256xbf16>, vector<8x256xf32> -> vector<8x256xf32>
    %c0_3 = arith.constant 0 : index
    %c0_4 = arith.constant 0 : index
    %3 = vector.load %arg2[%c0_3, %c0_4] : memref<1x256xf32, #tpu.memory_space<vmem>>, vector<1x256xf32>
    %4 = vector.broadcast %3 : vector<1x256xf32> to vector<8x256xf32>
    %5 = arith.addf %2, %4 : vector<8x256xf32>
    %cst_5 = arith.constant 0.000000e+00 : f32
    %6 = vector.broadcast %cst_5 : f32 to vector<8x256xf32>
    %7 = arith.maximumf %5, %6 : vector<8x256xf32>
    %8 = arith.truncf %7 : vector<8x256xf32> to vector<8x256xbf16>
    %c0_6 = arith.constant 0 : index
    %c0_7 = arith.constant 0 : index
    %9 = vector.load %arg3[%c0_6, %c0_7] : memref<256x384xbf16, #tpu.memory_space<vmem>>, vector<256x384xbf16>
    %cst_8 = arith.constant dense<0.000000e+00> : vector<8x384xf32>
    %10 = tpu.matmul %8, %9, %cst_8 {dimension_numbers = #tpu.dot_dimension_numbers<[1], [0], [0], [1], [0, 0, 1, 1], [], []>} : vector<8x256xbf16>, vector<256x384xbf16>, vector<8x384xf32> -> vector<8x384xf32>
    %c0_9 = arith.constant 0 : index
    %c0_10 = arith.constant 0 : index
    %11 = vector.load %arg4[%c0_9, %c0_10] : memref<1x384xf32, #tpu.memory_space<vmem>>, vector<1x384xf32>
    %12 = vector.broadcast %11 : vector<1x384xf32> to vector<8x384xf32>
    %13 = arith.addf %10, %12 : vector<8x384xf32>
    %c0_11 = arith.constant 0 : index
    %c0_12 = arith.constant 0 : index
    %14 = vector.load %arg5[%c0_11, %c0_12] : memref<8x384xf32, #tpu.memory_space<vmem>>, vector<8x384xf32>
    tpu.vector_store %arg5[%c0_11, %c0_12], %13 {strides = array<i32>} : memref<8x384xf32, #tpu.memory_space<vmem>>, vector<8x384xf32>,
    return
  }
}

</mosaic_0001>

<llo_original>
// kernel: tpu_custom_call.1
$region0: #{tpu_custom_call.1}
  #allocation0 [shape = 'u32[]', space=smem, size = 0x4, offset = 0x4, fixed_abs, tag = 'smem constant byte address 0x4 - core index']
  #allocation1 [shape = 'u32[144,128]{1,0:T(1,128)}', space=vmem, size = 0x12000, scoped, tag = 'internal scratch']
  %s0 = inlined_call_operand.hbm [shape: bf16[8,1152], index: 0, kind: input, shape index: {}]
  %s1 = inlined_call_operand.hbm [shape: bf16[1152,256], index: 1, kind: input, shape index: {}]
  %s2 = inlined_call_operand.vmem [shape: f32[1,256], index: 2, kind: input, shape index: {}]
  %s3 = inlined_call_operand.hbm [shape: bf16[256,384], index: 3, kind: input, shape index: {}]
  %s4 = inlined_call_operand.vmem [shape: f32[1,384], index: 4, kind: input, shape index: {}]
  %s5 = inlined_call_operand.hbm [shape: f32[8,384], index: 5, kind: output, shape index: {}]
  %s6 = sld [smem:[#allocation0]]
  $region42: #{tpu_custom_call.1} parent=0
    _
  %s8 = ssub.s32 1, %s6
  %s9 = scalar_select 0, %s8, %s6
  $region1: #{tpu_custom_call.1} parent=0
    #allocation2 [shape = 'u8[18432]{0}', space=vmem, size = 0x4800, scoped, tag = 'input window, operand 0, single buffered']
    #allocation3 [shape = 's32[1]{0}', space=sflag, size = 0x4, scoped, tag = 'scoped memory for tpu_custom_call.1']
    #allocation4 [shape = 's32[1]{0}', space=sflag, size = 0x4, scoped, tag = 'scoped memory for tpu_custom_call.1']
    #allocation5 [shape = 'u8[589824]{0}', space=vmem, size = 0x90000, scoped, tag = 'input window, operand 1, single buffered']
    #allocation6 [shape = 's32[1]{0}', space=sflag, size = 0x4, scoped, tag = 'scoped memory for tpu_custom_call.1']
    #allocation7 [shape = 'u8[196608]{0}', space=vmem, size = 0x30000, scoped, tag = 'input window, operand 3, single buffered']
    #allocation8 [shape = 'u8[12288]{0}', space=vmem, size = 0x3000, scoped, tag = 'output window, operand 0, single buffered']
    %10 = vsyncpa [#allocation3], 0
    %11 = vsyncpa [#allocation6], 0
    %12 = vsyncpa [#allocation4], 0
    // Predicated region
    $region2: #{tpu_custom_call.1} parent=1 // pred_check
      _
    $region3: #{tpu_custom_call.1} parent=1 // pred_check_branch
      %14 = sbr.rel (0) target = $region5
    $region4: #{tpu_custom_call.1} parent=1 // pred_region
      %s16 = ssub.s32 576, 576
      %17 = vsyncadd [#allocation3], %s16
      %s19 = sshll.u32 [#allocation2], 4
      %s20 = int_to_ptr.vmem [resolvable:$true] %s19
      %22 = dma.hbm_to_vmem [thread:$0]  %s0, 576, %s20, [#allocation3]
    $region5: #{tpu_custom_call.1} parent=1 // pred_fallthru
      _
    // Predicated region
    $region6: #{tpu_custom_call.1} parent=1 // pred_check
      _
    $region7: #{tpu_custom_call.1} parent=1 // pred_check_branch
      %24 = sbr.rel (0) target = $region9
    $region8: #{tpu_custom_call.1} parent=1 // pred_region
      %s26 = ssub.s32 18432, 18432
      %27 = vsyncadd [#allocation6], %s26
      %s28 = sshll.u32 [#allocation5], 4
      %s29 = int_to_ptr.vmem [resolvable:$true] %s28
      %34 = dma.hbm_to_vmem [thread:$0]  %s1, 18432, %s29, [#allocation6], 128, 128, 8
    $region9: #{tpu_custom_call.1} parent=1 // pred_fallthru
      _
    // Predicated region
    $region10: #{tpu_custom_call.1} parent=1 // pred_check
      _
    $region11: #{tpu_custom_call.1} parent=1 // pred_check_branch
      %36 = sbr.rel (0) target = $region13
    $region12: #{tpu_custom_call.1} parent=1 // pred_region
      _
    $region13: #{tpu_custom_call.1} parent=1 // pred_fallthru
      _
    // Predicated region
    $region14: #{tpu_custom_call.1} parent=1 // pred_check
      _
    $region15: #{tpu_custom_call.1} parent=1 // pred_check_branch
      %38 = sbr.rel (0) target = $region17
    $region16: #{tpu_custom_call.1} parent=1 // pred_region
      %s40 = ssub.s32 6144, 6144
      %41 = vsyncadd [#allocation6], %s40
      %s42 = sshll.u32 [#allocation7], 4
      %s43 = int_to_ptr.vmem [resolvable:$true] %s42
      %48 = dma.hbm_to_vmem [thread:$0]  %s3, 6144, %s43, [#allocation6], 192, 192, 12
    $region17: #{tpu_custom_call.1} parent=1 // pred_fallthru
      _
    // Predicated region
    $region18: #{tpu_custom_call.1} parent=1 // pred_check
      _
    $region19: #{tpu_custom_call.1} parent=1 // pred_check_branch
      %50 = sbr.rel (0) target = $region21
    $region20: #{tpu_custom_call.1} parent=1 // pred_region
      _
    $region21: #{tpu_custom_call.1} parent=1 // pred_fallthru
      _
    // Predicated region
    $region22: #{tpu_custom_call.1} parent=1 // pred_check
      _
    $region23: #{tpu_custom_call.1} parent=1 // pred_check_branch
      %52 = sbr.rel (0) target = $region25
    $region24: #{tpu_custom_call.1} parent=1 // pred_region
      %53 = dma.done [#allocation3], 576
    $region25: #{tpu_custom_call.1} parent=1 // pred_fallthru
      _
    // Predicated region
    $region26: #{tpu_custom_call.1} parent=1 // pred_check
      _
    $region27: #{tpu_custom_call.1} parent=1 // pred_check_branch
      %55 = sbr.rel (0) target = $region29
    $region28: #{tpu_custom_call.1} parent=1 // pred_region
      %56 = dma.done [#allocation6], 18432
    $region29: #{tpu_custom_call.1} parent=1 // pred_fallthru
      _
    // Predicated region
    $region30: #{tpu_custom_call.1} parent=1 // pred_check
      _
    $region31: #{tpu_custom_call.1} parent=1 // pred_check_branch
      %58 = sbr.rel (0) target = $region33
    $region32: #{tpu_custom_call.1} parent=1 // pred_region
      %59 = dma.done [#allocation6], 6144
    $region33: #{tpu_custom_call.1} parent=1 // pred_fallthru
      _
    %v61 = vld [vmem:[#allocation2] sm:$0xff]
    %v62 = vld [vmem:[#allocation2 + $0x8] sm:$0xff]
    %v63 = vld [vmem:[#allocation2 + $0x10] sm:$0xff]
    %v64 = vld [vmem:[#allocation2 + $0x18] sm:$0xff]
    %v65 = vld [vmem:[#allocation2 + $0x20] sm:$0xf]
    %v66 = vld [vmem:[#allocation5] sm:$0xff]
    %v67 = vld [vmem:[#allocation5 + $0x8] sm:$0xff]
    %v68 = vld [vmem:[#allocation5 + $0x10] sm:$0xff]
    %v69 = vld [vmem:[#allocation5 + $0x18] sm:$0xff]
    %v70 = vld [vmem:[#allocation5 + $0x20] sm:$0xff]
    %v71 = vld [vmem:[#allocation5 + $0x28] sm:$0xff]
    %v72 = vld [vmem:[#allocation5 + $0x30] sm:$0xff]
    %v73 = vld [vmem:[#allocation5 + $0x38] sm:$0xff]
    %v74 = vld [vmem:[#allocation5 + $0x40] sm:$0xff]
    %v75 = vld [vmem:[#allocation5 + $0x48] sm:$0xff]
    %v76 = vld [vmem:[#allocation5 + $0x50] sm:$0xff]
    %v77 = vld [vmem:[#allocation5 + $0x58] sm:$0xff]
    %v78 = vld [vmem:[#allocation5 + $0x60] sm:$0xff]
    %v79 = vld [vmem:[#allocation5 + $0x68] sm:$0xff]
    %v80 = vld [vmem:[#allocation5 + $0x70] sm:$0xff]
    %v81 = vld [vmem:[#allocation5 + $0x78] sm:$0xff]
    %v82 = vld [vmem:[#allocation5 + $0x80] sm:$0xff]
    %v83 = vld [vmem:[#allocation5 + $0x88] sm:$0xff]
    %v84 = vld [vmem:[#allocation5 + $0x90] sm:$0xff]
    %v85 = vld [vmem:[#allocation5 + $0x98] sm:$0xff]
    %v86 = vld [vmem:[#allocation5 + $0xa0] sm:$0xff]
    %v87 = vld [vmem:[#allocation5 + $0xa8] sm:$0xff]
    %v88 = vld [vmem:[#allocation5 + $0xb0] sm:$0xff]
    %v89 = vld [vmem:[#allocation5 + $0xb8] sm:$0xff]
    %v90 = vld [vmem:[#allocation5 + $0xc0] sm:$0xff]
    %v91 = vld [vmem:[#allocation5 + $0xc8] sm:$0xff]
    %v92 = vld [vmem:[#allocation5 + $0xd0] sm:$0xff]
    %v93 = vld [vmem:[#allocation5 + $0xd8] sm:$0xff]
    %v94 = vld [vmem:[#allocation5 + $0xe0] sm:$0xff]
    %v95 = vld [vmem:[#allocation5 + $0xe8] sm:$0xff]
    %v96 = vld [vmem:[#allocation5 + $0xf0] sm:$0xff]
    %v97 = vld [vmem:[#allocation5 + $0xf8] sm:$0xff]
    %v98 = vld [vmem:[#allocation5 + $0x100] sm:$0xff]
    %v99 = vld [vmem:[#allocation5 + $0x108] sm:$0xff]
    %v100 = vld [vmem:[#allocation5 + $0x110] sm:$0xff]
    %v101 = vld [vmem:[#allocation5 + $0x118] sm:$0xff]
    %v102 = vld [vmem:[#allocation5 + $0x120] sm:$0xff]
    %v103 = vld [vmem:[#allocation5 + $0x128] sm:$0xff]
    %v104 = vld [vmem:[#allocation5 + $0x130] sm:$0xff]
    %v105 = vld [vmem:[#allocation5 + $0x138] sm:$0xff]
    %v106 = vld [vmem:[#allocation5 + $0x140] sm:$0xff]
    %v107 = vld [vmem:[#allocation5 + $0x148] sm:$0xff]
    %v108 = vld [vmem:[#allocation5 + $0x150] sm:$0xff]
    %v109 = vld [vmem:[#allocation5 + $0x158] sm:$0xff]
    %v110 = vld [vmem:[#allocation5 + $0x160] sm:$0xff]
    %v111 = vld [vmem:[#allocation5 + $0x168] sm:$0xff]
    %v112 = vld [vmem:[#allocation5 + $0x170] sm:$0xff]
    %v113 = vld [vmem:[#allocation5 + $0x178] sm:$0xff]
    %v114 = vld [vmem:[#allocation5 + $0x180] sm:$0xff]
    %v115 = vld [vmem:[#allocation5 + $0x188] sm:$0xff]
    %v116 = vld [vmem:[#allocation5 + $0x190] sm:$0xff]
    %v117 = vld [vmem:[#allocation5 + $0x198] sm:$0xff]
    %v118 = vld [vmem:[#allocation5 + $0x1a0] sm:$0xff]
    %v119 = vld [vmem:[#allocation5 + $0x1a8] sm:$0xff]
    %v120 = vld [vmem:[#allocation5 + $0x1b0] sm:$0xff]
    %v121 = vld [vmem:[#allocation5 + $0x1b8] sm:$0xff]
    %v122 = vld [vmem:[#allocation5 + $0x1c0] sm:$0xff]
    %v123 = vld [vmem:[#allocation5 + $0x1c8] sm:$0xff]
    %v124 = vld [vmem:[#allocation5 + $0x1d0] sm:$0xff]
    %v125 = vld [vmem:[#allocation5 + $0x1d8] sm:$0xff]
    %v126 = vld [vmem:[#allocation5 + $0x1e0] sm:$0xff]
    %v127 = vld [vmem:[#allocation5 + $0x1e8] sm:$0xff]
    %v128 = vld [vmem:[#allocation5 + $0x1f0] sm:$0xff]
    %v129 = vld [vmem:[#allocation5 + $0x1f8] sm:$0xff]
    %v130 = vld [vmem:[#allocation5 + $0x200] sm:$0xff]
    %v131 = vld [vmem:[#allocation5 + $0x208] sm:$0xff]
    %v132 = vld [vmem:[#allocation5 + $0x210] sm:$0xff]
    %v133 = vld [vmem:[#allocation5 + $0x218] sm:$0xff]
    %v134 = vld [vmem:[#allocation5 + $0x220] sm:$0xff]
    %v135 = vld [vmem:[#allocation5 + $0x228] sm:$0xff]
    %v136 = vld [vmem:[#allocation5 + $0x230] sm:$0xff]
    %v137 = vld [vmem:[#allocation5 + $0x238] sm:$0xff]
    %v138 = vld [vmem:[#allocation5 + $0x240] sm:$0xff]
    %v139 = vld [vmem:[#allocation5 + $0x248] sm:$0xff]
    %v140 = vld [vmem:[#allocation5 + $0x250] sm:$0xff]
    %v141 = vld [vmem:[#allocation5 + $0x258] sm:$0xff]
    %v142 = vld [vmem:[#allocation5 + $0x260] sm:$0xff]
    %v143 = vld [vmem:[#allocation5 + $0x268] sm:$0xff]
    %v144 = vld [vmem:[#allocation5 + $0x270] sm:$0xff]
    %v145 = vld [vmem:[#allocation5 + $0x278] sm:$0xff]
    %v146 = vld [vmem:[#allocation5 + $0x280] sm:$0xff]
    %v147 = vld [vmem:[#allocation5 + $0x288] sm:$0xff]
    %v148 = vld [vmem:[#allocation5 + $0x290] sm:$0xff]
    %v149 = vld [vmem:[#allocation5 + $0x298] sm:$0xff]
    %v150 = vld [vmem:[#allocation5 + $0x2a0] sm:$0xff]
    %v151 = vld [vmem:[#allocation5 + $0x2a8] sm:$0xff]
    %v152 = vld [vmem:[#allocation5 + $0x2b0] sm:$0xff]
    %v153 = vld [vmem:[#allocation5 + $0x2b8] sm:$0xff]
    %v154 = vld [vmem:[#allocation5 + $0x2c0] sm:$0xff]
    %v155 = vld [vmem:[#allocation5 + $0x2c8] sm:$0xff]
    %v156 = vld [vmem:[#allocation5 + $0x2d0] sm:$0xff]
    %v157 = vld [vmem:[#allocation5 + $0x2d8] sm:$0xff]
    %v158 = vld [vmem:[#allocation5 + $0x2e0] sm:$0xff]
    %v159 = vld [vmem:[#allocation5 + $0x2e8] sm:$0xff]
    %v160 = vld [vmem:[#allocation5 + $0x2f0] sm:$0xff]
    %v161 = vld [vmem:[#allocation5 + $0x2f8] sm:$0xff]
    %v162 = vld [vmem:[#allocation5 + $0x300] sm:$0xff]
    %v163 = vld [vmem:[#allocation5 + $0x308] sm:$0xff]
    %v164 = vld [vmem:[#allocation5 + $0x310] sm:$0xff]
    %v165 = vld [vmem:[#allocation5 + $0x318] sm:$0xff]
    %v166 = vld [vmem:[#allocation5 + $0x320] sm:$0xff]
    %v167 = vld [vmem:[#allocation5 + $0x328] sm:$0xff]
    %v168 = vld [vmem:[#allocation5 + $0x330] sm:$0xff]
    %v169 = vld [vmem:[#allocation5 + $0x338] sm:$0xff]
    %v170 = vld [vmem:[#allocation5 + $0x340] sm:$0xff]
    %v171 = vld [vmem:[#allocation5 + $0x348] sm:$0xff]
    %v172 = vld [vmem:[#allocation5 + $0x350] sm:$0xff]
    %v173 = vld [vmem:[#allocation5 + $0x358] sm:$0xff]
    %v174 = vld [vmem:[#allocation5 + $0x360] sm:$0xff]
    %v175 = vld [vmem:[#allocation5 + $0x368] sm:$0xff]
    %v176 = vld [vmem:[#allocation5 + $0x370] sm:$0xff]
    %v177 = vld [vmem:[#allocation5 + $0x378] sm:$0xff]
    %v178 = vld [vmem:[#allocation5 + $0x380] sm:$0xff]
    %v179 = vld [vmem:[#allocation5 + $0x388] sm:$0xff]
    %v180 = vld [vmem:[#allocation5 + $0x390] sm:$0xff]
    %v181 = vld [vmem:[#allocation5 + $0x398] sm:$0xff]
    %v182 = vld [vmem:[#allocation5 + $0x3a0] sm:$0xff]
    %v183 = vld [vmem:[#allocation5 + $0x3a8] sm:$0xff]
    %v184 = vld [vmem:[#allocation5 + $0x3b0] sm:$0xff]
    %v185 = vld [vmem:[#allocation5 + $0x3b8] sm:$0xff]
    %v186 = vld [vmem:[#allocation5 + $0x3c0] sm:$0xff]
    %v187 = vld [vmem:[#allocation5 + $0x3c8] sm:$0xff]
    %v188 = vld [vmem:[#allocation5 + $0x3d0] sm:$0xff]
    %v189 = vld [vmem:[#allocation5 + $0x3d8] sm:$0xff]
    %v190 = vld [vmem:[#allocation5 + $0x3e0] sm:$0xff]
    %v191 = vld [vmem:[#allocation5 + $0x3e8] sm:$0xff]
    %v192 = vld [vmem:[#allocation5 + $0x3f0] sm:$0xff]
    %v193 = vld [vmem:[#allocation5 + $0x3f8] sm:$0xff]
    %v194 = vld [vmem:[#allocation5 + $0x400] sm:$0xff]
    %v195 = vld [vmem:[#allocation5 + $0x408] sm:$0xff]
    %v196 = vld [vmem:[#allocation5 + $0x410] sm:$0xff]
    %v197 = vld [vmem:[#allocation5 + $0x418] sm:$0xff]
    %v198 = vld [vmem:[#allocation5 + $0x420] sm:$0xff]
    %v199 = vld [vmem:[#allocation5 + $0x428] sm:$0xff]
    %v200 = vld [vmem:[#allocation5 + $0x430] sm:$0xff]
    %v201 = vld [vmem:[#allocation5 + $0x438] sm:$0xff]
    %v202 = vld [vmem:[#allocation5 + $0x440] sm:$0xff]
    %v203 = vld [vmem:[#allocation5 + $0x448] sm:$0xff]
    %v204 = vld [vmem:[#allocation5 + $0x450] sm:$0xff]
    %v205 = vld [vmem:[#allocation5 + $0x458] sm:$0xff]
    %v206 = vld [vmem:[#allocation5 + $0x460] sm:$0xff]
    %v207 = vld [vmem:[#allocation5 + $0x468] sm:$0xff]
    %v208 = vld [vmem:[#allocation5 + $0x470] sm:$0xff]
    %v209 = vld [vmem:[#allocation5 + $0x478] sm:$0xff]
    %v210 = vld [vmem:[%s2] sm:$0x3]
    %v212 = vlaneseq
    %v213 = vshrl.u32 %v212, 7
    %v214 = vsub.s32 0, %v213
    %v215 = vrot.slane %v210, %v214
    %v216 = vlaneseq
    %v217 = vshrl.u32 %v216, 7
    %v218 = vsub.s32 1, %v217
    %v219 = vrot.slane %v210, %v218
    %v227 = vunpack.c.l.b16 %v61
    %v228 = vunpack.c.h.b16 %v61
    %v229 = vunpack.c.l.b16 %v62
    %v230 = vunpack.c.h.b16 %v62
    %v231 = vunpack.c.l.b16 %v63
    %v232 = vunpack.c.h.b16 %v63
    %v233 = vunpack.c.l.b16 %v64
    %v234 = vunpack.c.h.b16 %v64
    %v235 = vunpack.c.l.b16 %v65
    %v236 = vpack.c.b16 %v227, %v227
    %v237 = vpack.c.b16 %v228, %v228
    %v238 = vpack.c.b16 %v229, %v229
    %v239 = vpack.c.b16 %v230, %v230
    %v240 = vpack.c.b16 %v231, %v231
    %v241 = vpack.c.b16 %v232, %v232
    %v242 = vpack.c.b16 %v233, %v233
    %v243 = vpack.c.b16 %v234, %v234
    %v244 = vpack.c.b16 %v235, %v235
    %v398 = vunpack.c.l.b16 %v66
    %v399 = vunpack.c.h.b16 %v66
    %v400 = vunpack.c.l.b16 %v67
    %v401 = vunpack.c.h.b16 %v67
    %v402 = vunpack.c.l.b16 %v68
    %v403 = vunpack.c.h.b16 %v68
    %v404 = vunpack.c.l.b16 %v69
    %v405 = vunpack.c.h.b16 %v69
    %v406 = vunpack.c.l.b16 %v70
    %v407 = vunpack.c.h.b16 %v70
    %v408 = vunpack.c.l.b16 %v71
    %v409 = vunpack.c.h.b16 %v71
    %v410 = vunpack.c.l.b16 %v72
    %v411 = vunpack.c.h.b16 %v72
    %v412 = vunpack.c.l.b16 %v73
    %v413 = vunpack.c.h.b16 %v73
    %v414 = vunpack.c.l.b16 %v74
    %v415 = vunpack.c.h.b16 %v74
    %v416 = vunpack.c.l.b16 %v75
    %v417 = vunpack.c.h.b16 %v75
    %v418 = vunpack.c.l.b16 %v76
    %v419 = vunpack.c.h.b16 %v76
    %v420 = vunpack.c.l.b16 %v77
    %v421 = vunpack.c.h.b16 %v77
    %v422 = vunpack.c.l.b16 %v78
    %v423 = vunpack.c.h.b16 %v78
    %v424 = vunpack.c.l.b16 %v79
    %v425 = vunpack.c.h.b16 %v79
    %v426 = vunpack.c.l.b16 %v80
    %v427 = vunpack.c.h.b16 %v80
    %v428 = vunpack.c.l.b16 %v81
    %v429 = vunpack.c.h.b16 %v81
    %v430 = vunpack.c.l.b16 %v82
    %v431 = vunpack.c.h.b16 %v82
    %v432 = vunpack.c.l.b16 %v83
    %v433 = vunpack.c.h.b16 %v83
    %v434 = vunpack.c.l.b16 %v84
    %v435 = vunpack.c.h.b16 %v84
    %v436 = vunpack.c.l.b16 %v85
    %v437 = vunpack.c.h.b16 %v85
    %v438 = vunpack.c.l.b16 %v86
    %v439 = vunpack.c.h.b16 %v86
    %v440 = vunpack.c.l.b16 %v87
    %v441 = vunpack.c.h.b16 %v87
    %v442 = vunpack.c.l.b16 %v88
    %v443 = vunpack.c.h.b16 %v88
    %v444 = vunpack.c.l.b16 %v89
    %v445 = vunpack.c.h.b16 %v89
    %v446 = vunpack.c.l.b16 %v90
    %v447 = vunpack.c.h.b16 %v90
    %v448 = vunpack.c.l.b16 %v91
    %v449 = vunpack.c.h.b16 %v91
    %v450 = vunpack.c.l.b16 %v92
    %v451 = vunpack.c.h.b16 %v92
    %v452 = vunpack.c.l.b16 %v93
    %v453 = vunpack.c.h.b16 %v93
    %v454 = vunpack.c.l.b16 %v94
    %v455 = vunpack.c.h.b16 %v94
    %v456 = vunpack.c.l.b16 %v95
    %v457 = vunpack.c.h.b16 %v95
    %v458 = vunpack.c.l.b16 %v96
    %v459 = vunpack.c.h.b16 %v96
    %v460 = vunpack.c.l.b16 %v97
    %v461 = vunpack.c.h.b16 %v97
    %v462 = vunpack.c.l.b16 %v98
    %v463 = vunpack.c.h.b16 %v98
    %v464 = vunpack.c.l.b16 %v99
    %v465 = vunpack.c.h.b16 %v99
    %v466 = vunpack.c.l.b16 %v100
    %v467 = vunpack.c.h.b16 %v100
    %v468 = vunpack.c.l.b16 %v101
    %v469 = vunpack.c.h.b16 %v101
    %v470 = vunpack.c.l.b16 %v102
    %v471 = vunpack.c.h.b16 %v102
    %v472 = vunpack.c.l.b16 %v103
    %v473 = vunpack.c.h.b16 %v103
    %v474 = vunpack.c.l.b16 %v104
    %v475 = vunpack.c.h.b16 %v104
    %v476 = vunpack.c.l.b16 %v105
    %v477 = vunpack.c.h.b16 %v105
    %v478 = vunpack.c.l.b16 %v106
    %v479 = vunpack.c.h.b16 %v106
    %v480 = vunpack.c.l.b16 %v107
    %v481 = vunpack.c.h.b16 %v107
    %v482 = vunpack.c.l.b16 %v108
    %v483 = vunpack.c.h.b16 %v108
    %v484 = vunpack.c.l.b16 %v109
    %v485 = vunpack.c.h.b16 %v109
    %v486 = vunpack.c.l.b16 %v110
    %v487 = vunpack.c.h.b16 %v110
    %v488 = vunpack.c.l.b16 %v111
    %v489 = vunpack.c.h.b16 %v111
    %v490 = vunpack.c.l.b16 %v112
    %v491 = vunpack.c.h.b16 %v112
    %v492 = vunpack.c.l.b16 %v113
    %v493 = vunpack.c.h.b16 %v113
    %v494 = vunpack.c.l.b16 %v114
    %v495 = vunpack.c.h.b16 %v114
    %v496 = vunpack.c.l.b16 %v115
    %v497 = vunpack.c.h.b16 %v115
    %v498 = vunpack.c.l.b16 %v116
    %v499 = vunpack.c.h.b16 %v116
    %v500 = vunpack.c.l.b16 %v117
    %v501 = vunpack.c.h.b16 %v117
    %v502 = vunpack.c.l.b16 %v118
    %v503 = vunpack.c.h.b16 %v118
    %v504 = vunpack.c.l.b16 %v119
    %v505 = vunpack.c.h.b16 %v119
    %v506 = vunpack.c.l.b16 %v120
    %v507 = vunpack.c.h.b16 %v120
    %v508 = vunpack.c.l.b16 %v121
    %v509 = vunpack.c.h.b16 %v121
    %v510 = vunpack.c.l.b16 %v122
    %v511 = vunpack.c.h.b16 %v122
    %v512 = vunpack.c.l.b16 %v123
    %v513 = vunpack.c.h.b16 %v123
    %v514 = vunpack.c.l.b16 %v124
    %v515 = vunpack.c.h.b16 %v124
    %v516 = vunpack.c.l.b16 %v125
    %v517 = vunpack.c.h.b16 %v125
    %v518 = vunpack.c.l.b16 %v126
    %v519 = vunpack.c.h.b16 %v126
    %v520 = vunpack.c.l.b16 %v127
    %v521 = vunpack.c.h.b16 %v127
    %v522 = vunpack.c.l.b16 %v128
    %v523 = vunpack.c.h.b16 %v128
    %v524 = vunpack.c.l.b16 %v129
    %v525 = vunpack.c.h.b16 %v129
    %v526 = vunpack.c.l.b16 %v130
    %v527 = vunpack.c.h.b16 %v130
    %v528 = vunpack.c.l.b16 %v131
    %v529 = vunpack.c.h.b16 %v131
    %v530 = vunpack.c.l.b16 %v132
    %v531 = vunpack.c.h.b16 %v132
    %v532 = vunpack.c.l.b16 %v133
    %v533 = vunpack.c.h.b16 %v133
    %v534 = vunpack.c.l.b16 %v134
    %v535 = vunpack.c.h.b16 %v134
    %v536 = vunpack.c.l.b16 %v135
    %v537 = vunpack.c.h.b16 %v135
    %v538 = vunpack.c.l.b16 %v136
    %v539 = vunpack.c.h.b16 %v136
    %v540 = vunpack.c.l.b16 %v137
    %v541 = vunpack.c.h.b16 %v137
    %v542 = vunpack.c.l.b16 %v138
    %v543 = vunpack.c.h.b16 %v138
    %v544 = vunpack.c.l.b16 %v139
    %v545 = vunpack.c.h.b16 %v139
    %v546 = vunpack.c.l.b16 %v140
    %v547 = vunpack.c.h.b16 %v140
    %v548 = vunpack.c.l.b16 %v141
    %v549 = vunpack.c.h.b16 %v141
    %v550 = vunpack.c.l.b16 %v142
    %v551 = vunpack.c.h.b16 %v142
    %v552 = vunpack.c.l.b16 %v143
    %v553 = vunpack.c.h.b16 %v143
    %v554 = vunpack.c.l.b16 %v144
    %v555 = vunpack.c.h.b16 %v144
    %v556 = vunpack.c.l.b16 %v145
    %v557 = vunpack.c.h.b16 %v145
    %v558 = vunpack.c.l.b16 %v146
    %v559 = vunpack.c.h.b16 %v146
    %v560 = vunpack.c.l.b16 %v147
    %v561 = vunpack.c.h.b16 %v147
    %v562 = vunpack.c.l.b16 %v148
    %v563 = vunpack.c.h.b16 %v148
    %v564 = vunpack.c.l.b16 %v149
    %v565 = vunpack.c.h.b16 %v149
    %v566 = vunpack.c.l.b16 %v150
    %v567 = vunpack.c.h.b16 %v150
    %v568 = vunpack.c.l.b16 %v151
    %v569 = vunpack.c.h.b16 %v151
    %v570 = vunpack.c.l.b16 %v152
    %v571 = vunpack.c.h.b16 %v152
    %v572 = vunpack.c.l.b16 %v153
    %v573 = vunpack.c.h.b16 %v153
    %v574 = vunpack.c.l.b16 %v154
    %v575 = vunpack.c.h.b16 %v154
    %v576 = vunpack.c.l.b16 %v155
    %v577 = vunpack.c.h.b16 %v155
    %v578 = vunpack.c.l.b16 %v156
    %v579 = vunpack.c.h.b16 %v156
    %v580 = vunpack.c.l.b16 %v157
    %v581 = vunpack.c.h.b16 %v157
    %v582 = vunpack.c.l.b16 %v158
    %v583 = vunpack.c.h.b16 %v158
    %v584 = vunpack.c.l.b16 %v159
    %v585 = vunpack.c.h.b16 %v159
    %v586 = vunpack.c.l.b16 %v160
    %v587 = vunpack.c.h.b16 %v160
    %v588 = vunpack.c.l.b16 %v161
    %v589 = vunpack.c.h.b16 %v161
    %v590 = vunpack.c.l.b16 %v162
    %v591 = vunpack.c.h.b16 %v162
    %v592 = vunpack.c.l.b16 %v163
    %v593 = vunpack.c.h.b16 %v163
    %v594 = vunpack.c.l.b16 %v164
    %v595 = vunpack.c.h.b16 %v164
    %v596 = vunpack.c.l.b16 %v165
    %v597 = vunpack.c.h.b16 %v165
    %v598 = vunpack.c.l.b16 %v166
    %v599 = vunpack.c.h.b16 %v166
    %v600 = vunpack.c.l.b16 %v167
    %v601 = vunpack.c.h.b16 %v167
    %v602 = vunpack.c.l.b16 %v168
    %v603 = vunpack.c.h.b16 %v168
    %v604 = vunpack.c.l.b16 %v169
    %v605 = vunpack.c.h.b16 %v169
    %v606 = vunpack.c.l.b16 %v170
    %v607 = vunpack.c.h.b16 %v170
    %v608 = vunpack.c.l.b16 %v171
    %v609 = vunpack.c.h.b16 %v171
    %v610 = vunpack.c.l.b16 %v172
    %v611 = vunpack.c.h.b16 %v172
    %v612 = vunpack.c.l.b16 %v173
    %v613 = vunpack.c.h.b16 %v173
    %v614 = vunpack.c.l.b16 %v174
    %v615 = vunpack.c.h.b16 %v174
    %v616 = vunpack.c.l.b16 %v175
    %v617 = vunpack.c.h.b16 %v175
    %v618 = vunpack.c.l.b16 %v176
    %v619 = vunpack.c.h.b16 %v176
    %v620 = vunpack.c.l.b16 %v177
    %v621 = vunpack.c.h.b16 %v177
    %v622 = vunpack.c.l.b16 %v178
    %v623 = vunpack.c.h.b16 %v178
    %v624 = vunpack.c.l.b16 %v179
    %v625 = vunpack.c.h.b16 %v179
    %v626 = vunpack.c.l.b16 %v180
    %v627 = vunpack.c.h.b16 %v180
    %v628 = vunpack.c.l.b16 %v181
    %v629 = vunpack.c.h.b16 %v181
    %v630 = vunpack.c.l.b16 %v182
    %v631 = vunpack.c.h.b16 %v182
    %v632 = vunpack.c.l.b16 %v183
    %v633 = vunpack.c.h.b16 %v183
    %v634 = vunpack.c.l.b16 %v184
    %v635 = vunpack.c.h.b16 %v184
    %v636 = vunpack.c.l.b16 %v185
    %v637 = vunpack.c.h.b16 %v185
    %v638 = vunpack.c.l.b16 %v186
    %v639 = vunpack.c.h.b16 %v186
    %v640 = vunpack.c.l.b16 %v187
    %v641 = vunpack.c.h.b16 %v187
    %v642 = vunpack.c.l.b16 %v188
    %v643 = vunpack.c.h.b16 %v188
    %v644 = vunpack.c.l.b16 %v189
    %v645 = vunpack.c.h.b16 %v189
    %v646 = vunpack.c.l.b16 %v190
    %v647 = vunpack.c.h.b16 %v190
    %v648 = vunpack.c.l.b16 %v191
    %v649 = vunpack.c.h.b16 %v191
    %v650 = vunpack.c.l.b16 %v192
    %v651 = vunpack.c.h.b16 %v192
    %v652 = vunpack.c.l.b16 %v193
    %v653 = vunpack.c.h.b16 %v193
    %v654 = vunpack.c.l.b16 %v194
    %v655 = vunpack.c.h.b16 %v194
    %v656 = vunpack.c.l.b16 %v195
    %v657 = vunpack.c.h.b16 %v195
    %v658 = vunpack.c.l.b16 %v196
    %v659 = vunpack.c.h.b16 %v196
    %v660 = vunpack.c.l.b16 %v197
    %v661 = vunpack.c.h.b16 %v197
    %v662 = vunpack.c.l.b16 %v198
    %v663 = vunpack.c.h.b16 %v198
    %v664 = vunpack.c.l.b16 %v199
    %v665 = vunpack.c.h.b16 %v199
    %v666 = vunpack.c.l.b16 %v200
    %v667 = vunpack.c.h.b16 %v200
    %v668 = vunpack.c.l.b16 %v201
    %v669 = vunpack.c.h.b16 %v201
    %v670 = vunpack.c.l.b16 %v202
    %v671 = vunpack.c.h.b16 %v202
    %v672 = vunpack.c.l.b16 %v203
    %v673 = vunpack.c.h.b16 %v203
    %v674 = vunpack.c.l.b16 %v204
    %v675 = vunpack.c.h.b16 %v204
    %v676 = vunpack.c.l.b16 %v205
    %v677 = vunpack.c.h.b16 %v205
    %v678 = vunpack.c.l.b16 %v206
    %v679 = vunpack.c.h.b16 %v206
    %v680 = vunpack.c.l.b16 %v207
    %v681 = vunpack.c.h.b16 %v207
    %v682 = vunpack.c.l.b16 %v208
    %v683 = vunpack.c.h.b16 %v208
    %v684 = vunpack.c.l.b16 %v209
    %v685 = vunpack.c.h.b16 %v209
    %v686 = vpack.c.b16 %v400, %v398
    %v687 = vpack.c.b16 %v401, %v399
    %v688 = vpack.c.b16 %v404, %v402
    %v689 = vpack.c.b16 %v405, %v403
    %v690 = vpack.c.b16 %v408, %v406
    %v691 = vpack.c.b16 %v409, %v407
    %v692 = vpack.c.b16 %v412, %v410
    %v693 = vpack.c.b16 %v413, %v411
    %v694 = vpack.c.b16 %v416, %v414
    %v695 = vpack.c.b16 %v417, %v415
    %v696 = vpack.c.b16 %v420, %v418
    %v697 = vpack.c.b16 %v421, %v419
    %v698 = vpack.c.b16 %v424, %v422
    %v699 = vpack.c.b16 %v425, %v423
    %v700 = vpack.c.b16 %v428, %v426
    %v701 = vpack.c.b16 %v429, %v427
    %v702 = vpack.c.b16 %v432, %v430
    %v703 = vpack.c.b16 %v433, %v431
    %v704 = vpack.c.b16 %v436, %v434
    %v705 = vpack.c.b16 %v437, %v435
    %v706 = vpack.c.b16 %v440, %v438
    %v707 = vpack.c.b16 %v441, %v439
    %v708 = vpack.c.b16 %v444, %v442
    %v709 = vpack.c.b16 %v445, %v443
    %v710 = vpack.c.b16 %v448, %v446
    %v711 = vpack.c.b16 %v449, %v447
    %v712 = vpack.c.b16 %v452, %v450
    %v713 = vpack.c.b16 %v453, %v451
    %v714 = vpack.c.b16 %v456, %v454
    %v715 = vpack.c.b16 %v457, %v455
    %v716 = vpack.c.b16 %v460, %v458
    %v717 = vpack.c.b16 %v461, %v459
    %v718 = vpack.c.b16 %v464, %v462
    %v719 = vpack.c.b16 %v465, %v463
    %v720 = vpack.c.b16 %v468, %v466
    %v721 = vpack.c.b16 %v469, %v467
    %v722 = vpack.c.b16 %v472, %v470
    %v723 = vpack.c.b16 %v473, %v471
    %v724 = vpack.c.b16 %v476, %v474
    %v725 = vpack.c.b16 %v477, %v475
    %v726 = vpack.c.b16 %v480, %v478
    %v727 = vpack.c.b16 %v481, %v479
    %v728 = vpack.c.b16 %v484, %v482
    %v729 = vpack.c.b16 %v485, %v483
    %v730 = vpack.c.b16 %v488, %v486
    %v731 = vpack.c.b16 %v489, %v487
    %v732 = vpack.c.b16 %v492, %v490
    %v733 = vpack.c.b16 %v493, %v491
    %v734 = vpack.c.b16 %v496, %v494
    %v735 = vpack.c.b16 %v497, %v495
    %v736 = vpack.c.b16 %v500, %v498
    %v737 = vpack.c.b16 %v501, %v499
    %v738 = vpack.c.b16 %v504, %v502
    %v739 = vpack.c.b16 %v505, %v503
    %v740 = vpack.c.b16 %v508, %v506
    %v741 = vpack.c.b16 %v509, %v507
    %v742 = vpack.c.b16 %v512, %v510
    %v743 = vpack.c.b16 %v513, %v511
    %v744 = vpack.c.b16 %v516, %v514
    %v745 = vpack.c.b16 %v517, %v515
    %v746 = vpack.c.b16 %v520, %v518
    %v747 = vpack.c.b16 %v521, %v519
    %v748 = vpack.c.b16 %v524, %v522
    %v749 = vpack.c.b16 %v525, %v523
    %v750 = vpack.c.b16 %v528, %v526
    %v751 = vpack.c.b16 %v529, %v527
    %v752 = vpack.c.b16 %v532, %v530
    %v753 = vpack.c.b16 %v533, %v531
    %v754 = vpack.c.b16 %v536, %v534
    %v755 = vpack.c.b16 %v537, %v535
    %v756 = vpack.c.b16 %v540, %v538
    %v757 = vpack.c.b16 %v541, %v539
    %v758 = vpack.c.b16 %v544, %v542
    %v759 = vpack.c.b16 %v545, %v543
    %v760 = vpack.c.b16 %v548, %v546
    %v761 = vpack.c.b16 %v549, %v547
    %v762 = vpack.c.b16 %v552, %v550
    %v763 = vpack.c.b16 %v553, %v551
    %v764 = vpack.c.b16 %v556, %v554
    %v765 = vpack.c.b16 %v557, %v555
    %v766 = vpack.c.b16 %v560, %v558
    %v767 = vpack.c.b16 %v561, %v559
    %v768 = vpack.c.b16 %v564, %v562
    %v769 = vpack.c.b16 %v565, %v563
    %v770 = vpack.c.b16 %v568, %v566
    %v771 = vpack.c.b16 %v569, %v567
    %v772 = vpack.c.b16 %v572, %v570
    %v773 = vpack.c.b16 %v573, %v571
    %v774 = vpack.c.b16 %v576, %v574
    %v775 = vpack.c.b16 %v577, %v575
    %v776 = vpack.c.b16 %v580, %v578
    %v777 = vpack.c.b16 %v581, %v579
    %v778 = vpack.c.b16 %v584, %v582
    %v779 = vpack.c.b16 %v585, %v583
    %v780 = vpack.c.b16 %v588, %v586
    %v781 = vpack.c.b16 %v589, %v587
    %v782 = vpack.c.b16 %v592, %v590
    %v783 = vpack.c.b16 %v593, %v591
    %v784 = vpack.c.b16 %v596, %v594
    %v785 = vpack.c.b16 %v597, %v595
    %v786 = vpack.c.b16 %v600, %v598
    %v787 = vpack.c.b16 %v601, %v599
    %v788 = vpack.c.b16 %v604, %v602
    %v789 = vpack.c.b16 %v605, %v603
    %v790 = vpack.c.b16 %v608, %v606
    %v791 = vpack.c.b16 %v609, %v607
    %v792 = vpack.c.b16 %v612, %v610
    %v793 = vpack.c.b16 %v613, %v611
    %v794 = vpack.c.b16 %v616, %v614
    %v795 = vpack.c.b16 %v617, %v615
    %v796 = vpack.c.b16 %v620, %v618
    %v797 = vpack.c.b16 %v621, %v619
    %v798 = vpack.c.b16 %v624, %v622
    %v799 = vpack.c.b16 %v625, %v623
    %v800 = vpack.c.b16 %v628, %v626
    %v801 = vpack.c.b16 %v629, %v627
    %v802 = vpack.c.b16 %v632, %v630
    %v803 = vpack.c.b16 %v633, %v631
    %v804 = vpack.c.b16 %v636, %v634
    %v805 = vpack.c.b16 %v637, %v635
    %v806 = vpack.c.b16 %v640, %v638
    %v807 = vpack.c.b16 %v641, %v639
    %v808 = vpack.c.b16 %v644, %v642
    %v809 = vpack.c.b16 %v645, %v643
    %v810 = vpack.c.b16 %v648, %v646
    %v811 = vpack.c.b16 %v649, %v647
    %v812 = vpack.c.b16 %v652, %v650
    %v813 = vpack.c.b16 %v653, %v651
    %v814 = vpack.c.b16 %v656, %v654
    %v815 = vpack.c.b16 %v657, %v655
    %v816 = vpack.c.b16 %v660, %v658
    %v817 = vpack.c.b16 %v661, %v659
    %v818 = vpack.c.b16 %v664, %v662
    %v819 = vpack.c.b16 %v665, %v663
    %v820 = vpack.c.b16 %v668, %v666
    %v821 = vpack.c.b16 %v669, %v667
    %v822 = vpack.c.b16 %v672, %v670
    %v823 = vpack.c.b16 %v673, %v671
    %v824 = vpack.c.b16 %v676, %v674
    %v825 = vpack.c.b16 %v677, %v675
    %v826 = vpack.c.b16 %v680, %v678
    %v827 = vpack.c.b16 %v681, %v679
    %v828 = vpack.c.b16 %v684, %v682
    %v829 = vpack.c.b16 %v685, %v683
    %974 = vmatprep.subr.bf16.mxu0 %v687
    %975 = vmatpush1.bf16.msra.mxu0 %v686
    %976 = vmatprep.subr.bf16.mxu0 %v689
    %977 = vmatpush1.bf16.msra.mxu0 %v688
    %978 = vmatprep.subr.bf16.mxu0 %v691
    %979 = vmatpush1.bf16.msra.mxu0 %v690
    %980 = vmatprep.subr.bf16.mxu0 %v693
    %981 = vmatpush1.bf16.msra.mxu0 %v692
    %982 = vmatprep.subr.bf16.mxu0 %v695
    %983 = vmatpush1.bf16.msra.mxu0 %v694
    %984 = vmatprep.subr.bf16.mxu0 %v697
    %985 = vmatpush1.bf16.msra.mxu0 %v696
    %986 = vmatprep.subr.bf16.mxu0 %v699
    %987 = vmatpush1.bf16.msra.mxu0 %v698
    %988 = vmatprep.subr.bf16.mxu0 %v701
    %989 = vmatpush1.bf16.msra.mxu0 %v700
    %990 = vmatprep.subr.bf16.mxu0 %v703
    %991 = vmatpush1.bf16.msra.mxu0 %v702
    %992 = vmatprep.subr.bf16.mxu0 %v705
    %993 = vmatpush1.bf16.msra.mxu0 %v704
    %994 = vmatprep.subr.bf16.mxu0 %v707
    %995 = vmatpush1.bf16.msra.mxu0 %v706
    %996 = vmatprep.subr.bf16.mxu0 %v709
    %997 = vmatpush1.bf16.msra.mxu0 %v708
    %998 = vmatprep.subr.bf16.mxu0 %v711
    %999 = vmatpush1.bf16.msra.mxu0 %v710
    %1000 = vmatprep.subr.bf16.mxu0 %v713
    %1001 = vmatpush1.bf16.msra.mxu0 %v712
    %1002 = vmatprep.subr.bf16.mxu0 %v715
    %1003 = vmatpush1.bf16.msra.mxu0 %v714
    %1004 = vmatprep.subr.bf16.mxu0 %v717
    %1005 = vmatpush1.bf16.msra.mxu0 %v716
    %1006 = vmatprep.mubr.bf16.mxu0 %v237
    %1007 = vmatmul.mubr.bf16.gmra.mrb[0].mxu0 %v236
    %v1008 = vpop.f32.mrb[0].mxu0
    %v1009 = vadd.f32 %v215, %v1008
    %v1010 = vpop.f32.mrb[0].mxu0
    %v1011 = vadd.f32 %v219, %v1010
    %v1012 = vpop.f32.mrb[0].mxu0
    %v1013 = vpop.f32.mrb[0].mxu0
    %1014 = vdwg.mxu0
    %1015 = vmatprep.subr.bf16.mxu0 %v719
    %1016 = vmatpush1.bf16.msra.mxu0 %v718
    %1017 = vmatprep.subr.bf16.mxu0 %v721
    %1018 = vmatpush1.bf16.msra.mxu0 %v720
    %1019 = vmatprep.subr.bf16.mxu0 %v723
    %1020 = vmatpush1.bf16.msra.mxu0 %v722
    %1021 = vmatprep.subr.bf16.mxu0 %v725
    %1022 = vmatpush1.bf16.msra.mxu0 %v724
    %1023 = vmatprep.subr.bf16.mxu0 %v727
    %1024 = vmatpush1.bf16.msra.mxu0 %v726
    %1025 = vmatprep.subr.bf16.mxu0 %v729
    %1026 = vmatpush1.bf16.msra.mxu0 %v728
    %1027 = vmatprep.subr.bf16.mxu0 %v731
    %1028 = vmatpush1.bf16.msra.mxu0 %v730
    %1029 = vmatprep.subr.bf16.mxu0 %v733
    %1030 = vmatpush1.bf16.msra.mxu0 %v732
    %1031 = vmatprep.subr.bf16.mxu0 %v735
    %1032 = vmatpush1.bf16.msra.mxu0 %v734
    %1033 = vmatprep.subr.bf16.mxu0 %v737
    %1034 = vmatpush1.bf16.msra.mxu0 %v736
    %1035 = vmatprep.subr.bf16.mxu0 %v739
    %1036 = vmatpush1.bf16.msra.mxu0 %v738
    %1037 = vmatprep.subr.bf16.mxu0 %v741
    %1038 = vmatpush1.bf16.msra.mxu0 %v740
    %1039 = vmatprep.subr.bf16.mxu0 %v743
    %1040 = vmatpush1.bf16.msra.mxu0 %v742
    %1041 = vmatprep.subr.bf16.mxu0 %v745
    %1042 = vmatpush1.bf16.msra.mxu0 %v744
    %1043 = vmatprep.subr.bf16.mxu0 %v747
    %1044 = vmatpush1.bf16.msra.mxu0 %v746
    %1045 = vmatprep.subr.bf16.mxu0 %v749
    %1046 = vmatpush1.bf16.msra.mxu0 %v748
    %1047 = vmatprep.mubr.bf16.mxu0 %v239
    %1048 = vmatmul.mubr.bf16.gmra.mrb[0].mxu0 %v238
    %v1049 = vpop.f32.mrb[0].mxu0
    %v1050 = vadd.f32 %v1009, %v1049
    %v1051 = vpop.f32.mrb[0].mxu0
    %v1052 = vadd.f32 %v1011, %v1051
    %v1053 = vpop.f32.mrb[0].mxu0
    %v1054 = vpop.f32.mrb[0].mxu0
    %1055 = vdwg.mxu0
    %1056 = vmatprep.subr.bf16.mxu0 %v751
    %1057 = vmatpush1.bf16.msra.mxu0 %v750
    %1058 = vmatprep.subr.bf16.mxu0 %v753
    %1059 = vmatpush1.bf16.msra.mxu0 %v752
    %1060 = vmatprep.subr.bf16.mxu0 %v755
    %1061 = vmatpush1.bf16.msra.mxu0 %v754
    %1062 = vmatprep.subr.bf16.mxu0 %v757
    %1063 = vmatpush1.bf16.msra.mxu0 %v756
    %1064 = vmatprep.subr.bf16.mxu0 %v759
    %1065 = vmatpush1.bf16.msra.mxu0 %v758
    %1066 = vmatprep.subr.bf16.mxu0 %v761
    %1067 = vmatpush1.bf16.msra.mxu0 %v760
    %1068 = vmatprep.subr.bf16.mxu0 %v763
    %1069 = vmatpush1.bf16.msra.mxu0 %v762
    %1070 = vmatprep.subr.bf16.mxu0 %v765
    %1071 = vmatpush1.bf16.msra.mxu0 %v764
    %1072 = vmatprep.subr.bf16.mxu0 %v767
    %1073 = vmatpush1.bf16.msra.mxu0 %v766
    %1074 = vmatprep.subr.bf16.mxu0 %v769
    %1075 = vmatpush1.bf16.msra.mxu0 %v768
    %1076 = vmatprep.subr.bf16.mxu0 %v771
    %1077 = vmatpush1.bf16.msra.mxu0 %v770
    %1078 = vmatprep.subr.bf16.mxu0 %v773
    %1079 = vmatpush1.bf16.msra.mxu0 %v772
    %1080 = vmatprep.subr.bf16.mxu0 %v775
    %1081 = vmatpush1.bf16.msra.mxu0 %v774
    %1082 = vmatprep.subr.bf16.mxu0 %v777
    %1083 = vmatpush1.bf16.msra.mxu0 %v776
    %1084 = vmatprep.subr.bf16.mxu0 %v779
    %1085 = vmatpush1.bf16.msra.mxu0 %v778
    %1086 = vmatprep.subr.bf16.mxu0 %v781
    %1087 = vmatpush1.bf16.msra.mxu0 %v780
    %1088 = vmatprep.mubr.bf16.mxu0 %v241
    %1089 = vmatmul.mubr.bf16.gmra.mrb[0].mxu0 %v240
    %v1090 = vpop.f32.mrb[0].mxu0
    %v1091 = vadd.f32 %v1050, %v1090
    %v1092 = vpop.f32.mrb[0].mxu0
    %v1093 = vadd.f32 %v1052, %v1092
    %v1094 = vpop.f32.mrb[0].mxu0
    %v1095 = vpop.f32.mrb[0].mxu0
    %1096 = vdwg.mxu0
    %1097 = vmatprep.subr.bf16.mxu0 %v783
    %1098 = vmatpush1.bf16.msra.mxu0 %v782
    %1099 = vmatprep.subr.bf16.mxu0 %v785
    %1100 = vmatpush1.bf16.msra.mxu0 %v784
    %1101 = vmatprep.subr.bf16.mxu0 %v787
    %1102 = vmatpush1.bf16.msra.mxu0 %v786
    %1103 = vmatprep.subr.bf16.mxu0 %v789
    %1104 = vmatpush1.bf16.msra.mxu0 %v788
    %1105 = vmatprep.subr.bf16.mxu0 %v791
    %1106 = vmatpush1.bf16.msra.mxu0 %v790
    %1107 = vmatprep.subr.bf16.mxu0 %v793
    %1108 = vmatpush1.bf16.msra.mxu0 %v792
    %1109 = vmatprep.subr.bf16.mxu0 %v795
    %1110 = vmatpush1.bf16.msra.mxu0 %v794
    %1111 = vmatprep.subr.bf16.mxu0 %v797
    %1112 = vmatpush1.bf16.msra.mxu0 %v796
    %1113 = vmatprep.subr.bf16.mxu0 %v799
    %1114 = vmatpush1.bf16.msra.mxu0 %v798
    %1115 = vmatprep.subr.bf16.mxu0 %v801
    %1116 = vmatpush1.bf16.msra.mxu0 %v800
    %1117 = vmatprep.subr.bf16.mxu0 %v803
    %1118 = vmatpush1.bf16.msra.mxu0 %v802
    %1119 = vmatprep.subr.bf16.mxu0 %v805
    %1120 = vmatpush1.bf16.msra.mxu0 %v804
    %1121 = vmatprep.subr.bf16.mxu0 %v807
    %1122 = vmatpush1.bf16.msra.mxu0 %v806
    %1123 = vmatprep.subr.bf16.mxu0 %v809
    %1124 = vmatpush1.bf16.msra.mxu0 %v808
    %1125 = vmatprep.subr.bf16.mxu0 %v811
    %1126 = vmatpush1.bf16.msra.mxu0 %v810
    %1127 = vmatprep.subr.bf16.mxu0 %v813
    %1128 = vmatpush1.bf16.msra.mxu0 %v812
    %1129 = vmatprep.mubr.bf16.mxu0 %v243
    %1130 = vmatmul.mubr.bf16.gmra.mrb[0].mxu0 %v242
    %v1131 = vpop.f32.mrb[0].mxu0
    %v1132 = vadd.f32 %v1091, %v1131
    %v1133 = vpop.f32.mrb[0].mxu0
    %v1134 = vadd.f32 %v1093, %v1133
    %v1135 = vpop.f32.mrb[0].mxu0
    %v1136 = vpop.f32.mrb[0].mxu0
    %1137 = vdwg.mxu0
    %1138 = vmatprep.subr.bf16.mxu0 %v815
    %1139 = vmatpush1.bf16.msra.mxu0 %v814
    %1140 = vmatprep.subr.bf16.mxu0 %v817
    %1141 = vmatpush1.bf16.msra.mxu0 %v816
    %1142 = vmatprep.subr.bf16.mxu0 %v819
    %1143 = vmatpush1.bf16.msra.mxu0 %v818
    %1144 = vmatprep.subr.bf16.mxu0 %v821
    %1145 = vmatpush1.bf16.msra.mxu0 %v820
    %1146 = vmatprep.subr.bf16.mxu0 %v823
    %1147 = vmatpush1.bf16.msra.mxu0 %v822
    %1148 = vmatprep.subr.bf16.mxu0 %v825
    %1149 = vmatpush1.bf16.msra.mxu0 %v824
    %1150 = vmatprep.subr.bf16.mxu0 %v827
    %1151 = vmatpush1.bf16.msra.mxu0 %v826
    %1152 = vmatprep.subr.bf16.mxu0 %v829
    %1153 = vmatpush1.bf16.msra.mxu0 %v828
    %1154 = vmatprep.subr.bf16.mxu0 0
    %1155 = vmatpush1.bf16.msra.mxu0 0
    %1156 = vmatprep.subr.bf16.mxu0 0
    %1157 = vmatpush1.bf16.msra.mxu0 0
    %1158 = vmatprep.subr.bf16.mxu0 0
    %1159 = vmatpush1.bf16.msra.mxu0 0
    %1160 = vmatprep.subr.bf16.mxu0 0
    %1161 = vmatpush1.bf16.msra.mxu0 0
    %1162 = vmatprep.subr.bf16.mxu0 0
    %1163 = vmatpush1.bf16.msra.mxu0 0
    %1164 = vmatprep.subr.bf16.mxu0 0
    %1165 = vmatpush1.bf16.msra.mxu0 0
    %1166 = vmatprep.subr.bf16.mxu0 0
    %1167 = vmatpush1.bf16.msra.mxu0 0
    %1168 = vmatprep.subr.bf16.mxu0 0
    %1169 = vmatpush1.bf16.msra.mxu0 0
    %1170 = vmatprep.mubr.bf16.mxu0 0
    %1171 = vmatmul.mubr.bf16.gmra.mrb[0].mxu0 %v244
    %v1172 = vpop.f32.mrb[0].mxu0
    %v1173 = vadd.f32 %v1132, %v1172
    %v1174 = vpop.f32.mrb[0].mxu0
    %v1175 = vadd.f32 %v1134, %v1174
    %v1176 = vpop.f32.mrb[0].mxu0
    %v1177 = vpop.f32.mrb[0].mxu0
    %1178 = vdwg.mxu0
    %v1179 = vmax.f32 %v1173, 0.0
    %v1180 = vmax.f32 %v1175, 0.0
    %v1181 = vpack.c.bf16 %v1179, %v1179
    %v1182 = vpack.c.bf16 %v1180, %v1180
    %v1183 = vld [vmem:[#allocation7] sm:$0xff]
    %v1184 = vld [vmem:[#allocation7 + $0x8] sm:$0xf]
    %v1185 = vld [vmem:[#allocation7 + $0xc] sm:$0xff]
    %v1186 = vld [vmem:[#allocation7 + $0x14] sm:$0xf]
    %v1187 = vld [vmem:[#allocation7 + $0x18] sm:$0xff]
    %v1188 = vld [vmem:[#allocation7 + $0x20] sm:$0xf]
    %v1189 = vld [vmem:[#allocation7 + $0x24] sm:$0xff]
    %v1190 = vld [vmem:[#allocation7 + $0x2c] sm:$0xf]
    %v1191 = vld [vmem:[#allocation7 + $0x30] sm:$0xff]
    %v1192 = vld [vmem:[#allocation7 + $0x38] sm:$0xf]
    %v1193 = vld [vmem:[#allocation7 + $0x3c] sm:$0xff]
    %v1194 = vld [vmem:[#allocation7 + $0x44] sm:$0xf]
    %v1195 = vld [vmem:[#allocation7 + $0x48] sm:$0xff]
    %v1196 = vld [vmem:[#allocation7 + $0x50] sm:$0xf]
    %v1197 = vld [vmem:[#allocation7 + $0x54] sm:$0xff]
    %v1198 = vld [vmem:[#allocation7 + $0x5c] sm:$0xf]
    %v1199 = vld [vmem:[#allocation7 + $0x60] sm:$0xff]
    %v1200 = vld [vmem:[#allocation7 + $0x68] sm:$0xf]
    %v1201 = vld [vmem:[#allocation7 + $0x6c] sm:$0xff]
    %v1202 = vld [vmem:[#allocation7 + $0x74] sm:$0xf]
    %v1203 = vld [vmem:[#allocation7 + $0x78] sm:$0xff]
    %v1204 = vld [vmem:[#allocation7 + $0x80] sm:$0xf]
    %v1205 = vld [vmem:[#allocation7 + $0x84] sm:$0xff]
    %v1206 = vld [vmem:[#allocation7 + $0x8c] sm:$0xf]
    %v1207 = vld [vmem:[#allocation7 + $0x90] sm:$0xff]
    %v1208 = vld [vmem:[#allocation7 + $0x98] sm:$0xf]
    %v1209 = vld [vmem:[#allocation7 + $0x9c] sm:$0xff]
    %v1210 = vld [vmem:[#allocation7 + $0xa4] sm:$0xf]
    %v1211 = vld [vmem:[#allocation7 + $0xa8] sm:$0xff]
    %v1212 = vld [vmem:[#allocation7 + $0xb0] sm:$0xf]
    %v1213 = vld [vmem:[#allocation7 + $0xb4] sm:$0xff]
    %v1214 = vld [vmem:[#allocation7 + $0xbc] sm:$0xf]
    %v1215 = vld [vmem:[#allocation7 + $0xc0] sm:$0xff]
    %v1216 = vld [vmem:[#allocation7 + $0xc8] sm:$0xf]
    %v1217 = vld [vmem:[#allocation7 + $0xcc] sm:$0xff]
    %v1218 = vld [vmem:[#allocation7 + $0xd4] sm:$0xf]
    %v1219 = vld [vmem:[#allocation7 + $0xd8] sm:$0xff]
    %v1220 = vld [vmem:[#allocation7 + $0xe0] sm:$0xf]
    %v1221 = vld [vmem:[#allocation7 + $0xe4] sm:$0xff]
    %v1222 = vld [vmem:[#allocation7 + $0xec] sm:$0xf]
    %v1223 = vld [vmem:[#allocation7 + $0xf0] sm:$0xff]
    %v1224 = vld [vmem:[#allocation7 + $0xf8] sm:$0xf]
    %v1225 = vld [vmem:[#allocation7 + $0xfc] sm:$0xff]
    %v1226 = vld [vmem:[#allocation7 + $0x104] sm:$0xf]
    %v1227 = vld [vmem:[#allocation7 + $0x108] sm:$0xff]
    %v1228 = vld [vmem:[#allocation7 + $0x110] sm:$0xf]
    %v1229 = vld [vmem:[#allocation7 + $0x114] sm:$0xff]
    %v1230 = vld [vmem:[#allocation7 + $0x11c] sm:$0xf]
    %v1231 = vld [vmem:[#allocation7 + $0x120] sm:$0xff]
    %v1232 = vld [vmem:[#allocation7 + $0x128] sm:$0xf]
    %v1233 = vld [vmem:[#allocation7 + $0x12c] sm:$0xff]
    %v1234 = vld [vmem:[#allocation7 + $0x134] sm:$0xf]
    %v1235 = vld [vmem:[#allocation7 + $0x138] sm:$0xff]
    %v1236 = vld [vmem:[#allocation7 + $0x140] sm:$0xf]
    %v1237 = vld [vmem:[#allocation7 + $0x144] sm:$0xff]
    %v1238 = vld [vmem:[#allocation7 + $0x14c] sm:$0xf]
    %v1239 = vld [vmem:[#allocation7 + $0x150] sm:$0xff]
    %v1240 = vld [vmem:[#allocation7 + $0x158] sm:$0xf]
    %v1241 = vld [vmem:[#allocation7 + $0x15c] sm:$0xff]
    %v1242 = vld [vmem:[#allocation7 + $0x164] sm:$0xf]
    %v1243 = vld [vmem:[#allocation7 + $0x168] sm:$0xff]
    %v1244 = vld [vmem:[#allocation7 + $0x170] sm:$0xf]
    %v1245 = vld [vmem:[#allocation7 + $0x174] sm:$0xff]
    %v1246 = vld [vmem:[#allocation7 + $0x17c] sm:$0xf]
    %v1247 = vld [vmem:[%s4] sm:$0x7]
    %v1249 = vlaneseq
    %v1250 = vshrl.u32 %v1249, 7
    %v1251 = vsub.s32 0, %v1250
    %v1252 = vrot.slane %v1247, %v1251
    %v1253 = vlaneseq
    %v1254 = vshrl.u32 %v1253, 7
    %v1255 = vsub.s32 1, %v1254
    %v1256 = vrot.slane %v1247, %v1255
    %v1257 = vlaneseq
    %v1258 = vshrl.u32 %v1257, 7
    %v1259 = vsub.s32 2, %v1258
    %v1260 = vrot.slane %v1247, %v1259
    %v1328 = vunpack.c.l.b16 %v1183
    %v1329 = vunpack.c.h.b16 %v1183
    %v1330 = vunpack.c.l.b16 %v1184
    %v1331 = vunpack.c.l.b16 %v1185
    %v1332 = vunpack.c.h.b16 %v1185
    %v1333 = vunpack.c.l.b16 %v1186
    %v1334 = vunpack.c.l.b16 %v1187
    %v1335 = vunpack.c.h.b16 %v1187
    %v1336 = vunpack.c.l.b16 %v1188
    %v1337 = vunpack.c.l.b16 %v1189
    %v1338 = vunpack.c.h.b16 %v1189
    %v1339 = vunpack.c.l.b16 %v1190
    %v1340 = vunpack.c.l.b16 %v1191
    %v1341 = vunpack.c.h.b16 %v1191
    %v1342 = vunpack.c.l.b16 %v1192
    %v1343 = vunpack.c.l.b16 %v1193
    %v1344 = vunpack.c.h.b16 %v1193
    %v1345 = vunpack.c.l.b16 %v1194
    %v1346 = vunpack.c.l.b16 %v1195
    %v1347 = vunpack.c.h.b16 %v1195
    %v1348 = vunpack.c.l.b16 %v1196
    %v1349 = vunpack.c.l.b16 %v1197
    %v1350 = vunpack.c.h.b16 %v1197
    %v1351 = vunpack.c.l.b16 %v1198
    %v1352 = vunpack.c.l.b16 %v1199
    %v1353 = vunpack.c.h.b16 %v1199
    %v1354 = vunpack.c.l.b16 %v1200
    %v1355 = vunpack.c.l.b16 %v1201
    %v1356 = vunpack.c.h.b16 %v1201
    %v1357 = vunpack.c.l.b16 %v1202
    %v1358 = vunpack.c.l.b16 %v1203
    %v1359 = vunpack.c.h.b16 %v1203
    %v1360 = vunpack.c.l.b16 %v1204
    %v1361 = vunpack.c.l.b16 %v1205
    %v1362 = vunpack.c.h.b16 %v1205
    %v1363 = vunpack.c.l.b16 %v1206
    %v1364 = vunpack.c.l.b16 %v1207
    %v1365 = vunpack.c.h.b16 %v1207
    %v1366 = vunpack.c.l.b16 %v1208
    %v1367 = vunpack.c.l.b16 %v1209
    %v1368 = vunpack.c.h.b16 %v1209
    %v1369 = vunpack.c.l.b16 %v1210
    %v1370 = vunpack.c.l.b16 %v1211
    %v1371 = vunpack.c.h.b16 %v1211
    %v1372 = vunpack.c.l.b16 %v1212
    %v1373 = vunpack.c.l.b16 %v1213
    %v1374 = vunpack.c.h.b16 %v1213
    %v1375 = vunpack.c.l.b16 %v1214
    %v1376 = vunpack.c.l.b16 %v1215
    %v1377 = vunpack.c.h.b16 %v1215
    %v1378 = vunpack.c.l.b16 %v1216
    %v1379 = vunpack.c.l.b16 %v1217
    %v1380 = vunpack.c.h.b16 %v1217
    %v1381 = vunpack.c.l.b16 %v1218
    %v1382 = vunpack.c.l.b16 %v1219
    %v1383 = vunpack.c.h.b16 %v1219
    %v1384 = vunpack.c.l.b16 %v1220
    %v1385 = vunpack.c.l.b16 %v1221
    %v1386 = vunpack.c.h.b16 %v1221
    %v1387 = vunpack.c.l.b16 %v1222
    %v1388 = vunpack.c.l.b16 %v1223
    %v1389 = vunpack.c.h.b16 %v1223
    %v1390 = vunpack.c.l.b16 %v1224
    %v1391 = vunpack.c.l.b16 %v1225
    %v1392 = vunpack.c.h.b16 %v1225
    %v1393 = vunpack.c.l.b16 %v1226
    %v1394 = vunpack.c.l.b16 %v1227
    %v1395 = vunpack.c.h.b16 %v1227
    %v1396 = vunpack.c.l.b16 %v1228
    %v1397 = vunpack.c.l.b16 %v1229
    %v1398 = vunpack.c.h.b16 %v1229
    %v1399 = vunpack.c.l.b16 %v1230
    %v1400 = vunpack.c.l.b16 %v1231
    %v1401 = vunpack.c.h.b16 %v1231
    %v1402 = vunpack.c.l.b16 %v1232
    %v1403 = vunpack.c.l.b16 %v1233
    %v1404 = vunpack.c.h.b16 %v1233
    %v1405 = vunpack.c.l.b16 %v1234
    %v1406 = vunpack.c.l.b16 %v1235
    %v1407 = vunpack.c.h.b16 %v1235
    %v1408 = vunpack.c.l.b16 %v1236
    %v1409 = vunpack.c.l.b16 %v1237
    %v1410 = vunpack.c.h.b16 %v1237
    %v1411 = vunpack.c.l.b16 %v1238
    %v1412 = vunpack.c.l.b16 %v1239
    %v1413 = vunpack.c.h.b16 %v1239
    %v1414 = vunpack.c.l.b16 %v1240
    %v1415 = vunpack.c.l.b16 %v1241
    %v1416 = vunpack.c.h.b16 %v1241
    %v1417 = vunpack.c.l.b16 %v1242
    %v1418 = vunpack.c.l.b16 %v1243
    %v1419 = vunpack.c.h.b16 %v1243
    %v1420 = vunpack.c.l.b16 %v1244
    %v1421 = vunpack.c.l.b16 %v1245
    %v1422 = vunpack.c.h.b16 %v1245
    %v1423 = vunpack.c.l.b16 %v1246
    %v1424 = vpack.c.b16 %v1331, %v1328
    %v1425 = vpack.c.b16 %v1332, %v1329
    %v1426 = vpack.c.b16 %v1333, %v1330
    %v1427 = vpack.c.b16 %v1337, %v1334
    %v1428 = vpack.c.b16 %v1338, %v1335
    %v1429 = vpack.c.b16 %v1339, %v1336
    %v1430 = vpack.c.b16 %v1343, %v1340
    %v1431 = vpack.c.b16 %v1344, %v1341
    %v1432 = vpack.c.b16 %v1345, %v1342
    %v1433 = vpack.c.b16 %v1349, %v1346
    %v1434 = vpack.c.b16 %v1350, %v1347
    %v1435 = vpack.c.b16 %v1351, %v1348
    %v1436 = vpack.c.b16 %v1355, %v1352
    %v1437 = vpack.c.b16 %v1356, %v1353
    %v1438 = vpack.c.b16 %v1357, %v1354
    %v1439 = vpack.c.b16 %v1361, %v1358
    %v1440 = vpack.c.b16 %v1362, %v1359
    %v1441 = vpack.c.b16 %v1363, %v1360
    %v1442 = vpack.c.b16 %v1367, %v1364
    %v1443 = vpack.c.b16 %v1368, %v1365
    %v1444 = vpack.c.b16 %v1369, %v1366
    %v1445 = vpack.c.b16 %v1373, %v1370
    %v1446 = vpack.c.b16 %v1374, %v1371
    %v1447 = vpack.c.b16 %v1375, %v1372
    %v1448 = vpack.c.b16 %v1379, %v1376
    %v1449 = vpack.c.b16 %v1380, %v1377
    %v1450 = vpack.c.b16 %v1381, %v1378
    %v1451 = vpack.c.b16 %v1385, %v1382
    %v1452 = vpack.c.b16 %v1386, %v1383
    %v1453 = vpack.c.b16 %v1387, %v1384
    %v1454 = vpack.c.b16 %v1391, %v1388
    %v1455 = vpack.c.b16 %v1392, %v1389
    %v1456 = vpack.c.b16 %v1393, %v1390
    %v1457 = vpack.c.b16 %v1397, %v1394
    %v1458 = vpack.c.b16 %v1398, %v1395
    %v1459 = vpack.c.b16 %v1399, %v1396
    %v1460 = vpack.c.b16 %v1403, %v1400
    %v1461 = vpack.c.b16 %v1404, %v1401
    %v1462 = vpack.c.b16 %v1405, %v1402
    %v1463 = vpack.c.b16 %v1409, %v1406
    %v1464 = vpack.c.b16 %v1410, %v1407
    %v1465 = vpack.c.b16 %v1411, %v1408
    %v1466 = vpack.c.b16 %v1415, %v1412
    %v1467 = vpack.c.b16 %v1416, %v1413
    %v1468 = vpack.c.b16 %v1417, %v1414
    %v1469 = vpack.c.b16 %v1421, %v1418
    %v1470 = vpack.c.b16 %v1422, %v1419
    %v1471 = vpack.c.b16 %v1423, %v1420
    %1520 = vmatprep.subr.bf16.mxu0 %v1425
    %1521 = vmatpush1.bf16.msra.mxu0 %v1424
    %1522 = vmatprep.subr.bf16.mxu0 %v1428
    %1523 = vmatpush1.bf16.msra.mxu0 %v1427
    %1524 = vmatprep.subr.bf16.mxu0 %v1431
    %1525 = vmatpush1.bf16.msra.mxu0 %v1430
    %1526 = vmatprep.subr.bf16.mxu0 %v1434
    %1527 = vmatpush1.bf16.msra.mxu0 %v1433
    %1528 = vmatprep.subr.bf16.mxu0 %v1437
    %1529 = vmatpush1.bf16.msra.mxu0 %v1436
    %1530 = vmatprep.subr.bf16.mxu0 %v1440
    %1531 = vmatpush1.bf16.msra.mxu0 %v1439
    %1532 = vmatprep.subr.bf16.mxu0 %v1443
    %1533 = vmatpush1.bf16.msra.mxu0 %v1442
    %1534 = vmatprep.subr.bf16.mxu0 %v1446
    %1535 = vmatpush1.bf16.msra.mxu0 %v1445
    %1536 = vmatprep.subr.bf16.mxu0 %v1449
    %1537 = vmatpush1.bf16.msra.mxu0 %v1448
    %1538 = vmatprep.subr.bf16.mxu0 %v1452
    %1539 = vmatpush1.bf16.msra.mxu0 %v1451
    %1540 = vmatprep.subr.bf16.mxu0 %v1455
    %1541 = vmatpush1.bf16.msra.mxu0 %v1454
    %1542 = vmatprep.subr.bf16.mxu0 %v1458
    %1543 = vmatpush1.bf16.msra.mxu0 %v1457
    %1544 = vmatprep.subr.bf16.mxu0 %v1461
    %1545 = vmatpush1.bf16.msra.mxu0 %v1460
    %1546 = vmatprep.subr.bf16.mxu0 %v1464
    %1547 = vmatpush1.bf16.msra.mxu0 %v1463
    %1548 = vmatprep.subr.bf16.mxu0 %v1467
    %1549 = vmatpush1.bf16.msra.mxu0 %v1466
    %1550 = vmatprep.subr.bf16.mxu0 %v1470
    %1551 = vmatpush1.bf16.msra.mxu0 %v1469
    %1552 = vmatprep.mubr.bf16.mxu0 %v1182
    %1553 = vmatmul.mubr.bf16.gmra.mrb[0].mxu0 %v1181
    %v1554 = vpop.f32.mrb[0].mxu0
    %v1555 = vadd.f32 %v1252, %v1554
    %v1556 = vpop.f32.mrb[0].mxu0
    %v1557 = vadd.f32 %v1256, %v1556
    %v1558 = vpop.f32.mrb[0].mxu0
    %v1559 = vpop.f32.mrb[0].mxu0
    %1560 = vdwg.mxu0
    %1561 = vmatprep.subr.bf16.mxu0 0
    %1562 = vmatpush1.bf16.msra.mxu0 %v1426
    %1563 = vmatprep.subr.bf16.mxu0 0
    %1564 = vmatpush1.bf16.msra.mxu0 %v1429
    %1565 = vmatprep.subr.bf16.mxu0 0
    %1566 = vmatpush1.bf16.msra.mxu0 %v1432
    %1567 = vmatprep.subr.bf16.mxu0 0
    %1568 = vmatpush1.bf16.msra.mxu0 %v1435
    %1569 = vmatprep.subr.bf16.mxu0 0
    %1570 = vmatpush1.bf16.msra.mxu0 %v1438
    %1571 = vmatprep.subr.bf16.mxu0 0
    %1572 = vmatpush1.bf16.msra.mxu0 %v1441
    %1573 = vmatprep.subr.bf16.mxu0 0
    %1574 = vmatpush1.bf16.msra.mxu0 %v1444
    %1575 = vmatprep.subr.bf16.mxu0 0
    %1576 = vmatpush1.bf16.msra.mxu0 %v1447
    %1577 = vmatprep.subr.bf16.mxu0 0
    %1578 = vmatpush1.bf16.msra.mxu0 %v1450
    %1579 = vmatprep.subr.bf16.mxu0 0
    %1580 = vmatpush1.bf16.msra.mxu0 %v1453
    %1581 = vmatprep.subr.bf16.mxu0 0
    %1582 = vmatpush1.bf16.msra.mxu0 %v1456
    %1583 = vmatprep.subr.bf16.mxu0 0
    %1584 = vmatpush1.bf16.msra.mxu0 %v1459
    %1585 = vmatprep.subr.bf16.mxu0 0
    %1586 = vmatpush1.bf16.msra.mxu0 %v1462
    %1587 = vmatprep.subr.bf16.mxu0 0
    %1588 = vmatpush1.bf16.msra.mxu0 %v1465
    %1589 = vmatprep.subr.bf16.mxu0 0
    %1590 = vmatpush1.bf16.msra.mxu0 %v1468
    %1591 = vmatprep.subr.bf16.mxu0 0
    %1592 = vmatpush1.bf16.msra.mxu0 %v1471
    %1593 = vmatprep.mubr.bf16.mxu0 %v1182
    %1594 = vmatmul.mubr.bf16.gmra.mrb[0].mxu0 %v1181
    %v1595 = vpop.f32.mrb[0].mxu0
    %v1596 = vadd.f32 %v1260, %v1595
    %v1597 = vpop.f32.mrb[0].mxu0
    %v1598 = vpop.f32.mrb[0].mxu0
    %v1599 = vpop.f32.mrb[0].mxu0
    %1600 = vdwg.mxu0
    %1601 = vst [vmem:[#allocation8] sm:$0xff] %v1555
    %1602 = vst [vmem:[#allocation8 + $0x8] sm:$0xff] %v1557
    %1603 = vst [vmem:[#allocation8 + $0x10] sm:$0xff] %v1596
    // Predicated region
    $region34: #{tpu_custom_call.1} parent=1 // pred_check
      _
    $region35: #{tpu_custom_call.1} parent=1 // pred_check_branch
      %1605 = sbr.rel (0) target = $region37
    $region36: #{tpu_custom_call.1} parent=1 // pred_region
      %s1607 = ssub.s32 384, 384
      %1608 = vsyncadd [#allocation4], %s1607
      %s1610 = sshll.u32 [#allocation8], 4
      %s1611 = int_to_ptr.vmem [resolvable:$true] %s1610
      %1613 = dma.vmem_to_hbm [thread:$0]  %s1611, 384, %s5, [#allocation4]
    $region37: #{tpu_custom_call.1} parent=1 // pred_fallthru
      _
    // Predicated region
    $region38: #{tpu_custom_call.1} parent=1 // pred_check
      _
    $region39: #{tpu_custom_call.1} parent=1 // pred_check_branch
      %1615 = sbr.rel (0) target = $region41
    $region40: #{tpu_custom_call.1} parent=1 // pred_region
      %1616 = dma.done [#allocation4], 384
    $region41: #{tpu_custom_call.1} parent=1 // pred_fallthru
      _
    %1617 = vsyncpa [#allocation3], 1
    %1618 = vsyncpa [#allocation6], 1
    %1619 = vsyncpa [#allocation4], 1

</llo_original>
